<compile_context>
chip_gen: v6e
topology: v6e:2x2x1
jax: 0.10.0
libtpu: 0.0.40
codegen_flags: <defaults>
</compile_context>

<pallas_src>
import functools

import jax
import jax.numpy as jnp
from jax import lax
from jax.experimental import pallas as pl
from jax.experimental.pallas import tpu as pltpu


def _round_up(x, m):
    return ((x + m - 1) // m) * m


def _context_atten_kernel(mt_ref, wm_ref, bias_ref, v_ref,          # inputs
                          scores_ref, logz_ref, ct_ref,             # outputs
                          m_ref, l_ref, acc_am_ref, acc_m_ref,      # scratch
                          *, t_valid, block_t):
    t = pl.program_id(0)
    num_tiles = pl.num_programs(0)

    @pl.when(t == 0)
    def _init():
        m_ref[...] = jnp.full(m_ref.shape, -jnp.inf, m_ref.dtype)
        l_ref[...] = jnp.zeros(l_ref.shape, l_ref.dtype)
        acc_am_ref[...] = jnp.zeros(acc_am_ref.shape, acc_am_ref.dtype)
        acc_m_ref[...] = jnp.zeros(acc_m_ref.shape, acc_m_ref.dtype)

    mt = mt_ref[...]                                  # (block_t, H), matmul dtype
    # MXU: Mt_tile @ Wm with f32 accumulation; hc @ W1.T enters as a bias row.
    pre = jnp.dot(mt, wm_ref[...],
                  preferred_element_type=jnp.float32) + bias_ref[...]
    tact = jnp.tanh(pre)                              # (block_t, H) f32  (EUP)
    # tanh(...) @ V  ==  lane reduction against the V row -> (block_t, 1)
    s = jnp.sum(tact * v_ref[...], axis=1, keepdims=True)

    # Mask padded tail rows out of the softmax statistics (static decision).
    if t_valid % block_t != 0:
        row_ids = t * block_t + lax.broadcasted_iota(jnp.int32, (block_t, 1), 0)
        s_stat = jnp.where(row_ids < t_valid, s, -jnp.inf)
    else:
        s_stat = s

    # Online logsumexp: running max + rescaled running sum-exp.
    m_prev = m_ref[...]                                            # (1, 1)
    m_cur = jnp.maximum(m_prev, jnp.max(s_stat, axis=0, keepdims=True))
    l_ref[...] = (l_ref[...] * jnp.exp(m_prev - m_cur)
                  + jnp.sum(jnp.exp(s_stat - m_cur), axis=0, keepdims=True))
    m_ref[...] = m_cur

    # Streaming pieces of ct = Σ (s_i - logZ)·Mt_i = Σ s_i·Mt_i − logZ·Σ Mt_i.
    # (Padded Mt rows are zero, so using raw s here is safe.)
    mt_f32 = mt.astype(jnp.float32)
    acc_am_ref[...] += jnp.sum(s * mt_f32, axis=0, keepdims=True)    # (1, H)
    acc_m_ref[...] += jnp.sum(mt_f32, axis=0, keepdims=True)         # (1, H)

    # Lane-dense (1, block_t) raw-score tile: move the (block_t, 1) column to
    # the lane axis with a select + sublane reduce (avoids relying on a
    # degenerate in-kernel transpose).
    sub_ids = lax.broadcasted_iota(jnp.int32, (block_t, block_t), 0)
    lane_ids = lax.broadcasted_iota(jnp.int32, (block_t, block_t), 1)
    scores_ref[...] = jnp.sum(jnp.where(sub_ids == lane_ids, s, 0.0),
                              axis=0, keepdims=True)

    @pl.when(t == num_tiles - 1)
    def _finalize():
        logz = m_ref[...] + jnp.log(l_ref[...])                    # (1, 1)
        logz_ref[...] = logz
        ct_ref[...] = acc_am_ref[...] - logz * acc_m_ref[...]


@functools.partial(
    jax.jit,
    static_argnames=("context_window", "hidden_dim", "matmul_dtype", "block_t"))
def context_atten_forward(inputs, hc, Wm, W1, V, *, context_window, hidden_dim,
                          matmul_dtype=jnp.float32, block_t=None):
    T, H = context_window, hidden_dim

    if block_t is None:
        block_t = _round_up(T, 8) if T <= 256 else 256
    if block_t % 8 != 0:
        raise ValueError("block_t must be a multiple of 8")
    T_pad = _round_up(T, block_t)
    num_tiles = T_pad // block_t
    if num_tiles > 1 and block_t % 128 != 0:
        raise ValueError("multi-tile block_t must be a multiple of 128 "
                         "(lane-tiled score output)")

    # Hoisted GEMV: hc @ W1.T -> (1, H) bias row. W1 never enters the kernel.
    bias = (hc.reshape(1, H) @ W1.T).astype(jnp.float32)
    v_row = V.reshape(1, H).astype(jnp.float32)

    Mt = inputs.reshape(T, H)
    if T_pad != T:
        Mt = jnp.pad(Mt, ((0, T_pad - T), (0, 0)))     # zero tail rows (masked)
    Mt = Mt.astype(matmul_dtype)
    Wm_c = Wm.astype(matmul_dtype)

    kernel = functools.partial(_context_atten_kernel,
                               t_valid=T, block_t=block_t)

    scores, logz, ct = pl.pallas_call(
        kernel,
        grid=(num_tiles,),
        in_specs=[
            pl.BlockSpec((block_t, H), lambda t: (t, 0)),   # Mt tile (streamed)
            pl.BlockSpec((H, H), lambda t: (0, 0)),         # Wm (resident)
            pl.BlockSpec((1, H), lambda t: (0, 0)),         # hc @ W1.T bias row
            pl.BlockSpec((1, H), lambda t: (0, 0)),         # V as a row
        ],
        out_specs=[
            pl.BlockSpec((1, block_t), lambda t: (0, t)),   # raw scores (lane-dense)
            pl.BlockSpec((1, 1), lambda t: (0, 0)),         # logZ
            pl.BlockSpec((1, H), lambda t: (0, 0)),         # ct
        ],
        out_shape=(
            jax.ShapeDtypeStruct((1, T_pad), jnp.float32),
            jax.ShapeDtypeStruct((1, 1), jnp.float32),
            jax.ShapeDtypeStruct((1, H), jnp.float32),
        ),
        scratch_shapes=[
            pltpu.VMEM((1, 1), jnp.float32),    # running max
            pltpu.VMEM((1, 1), jnp.float32),    # running sum-exp
            pltpu.VMEM((1, H), jnp.float32),    # Σ s_i · Mt_i
            pltpu.VMEM((1, H), jnp.float32),    # Σ Mt_i
        ],
        compiler_params=pltpu.CompilerParams(
            dimension_semantics=("arbitrary",),      # reduction over T tiles
            vmem_limit_bytes=32 * 1024 * 1024),
    )(Mt, Wm_c, bias, v_row)

    # Tiny fused epilogue: alphat_i = s_i - logsumexp(s); drop padded lanes.
    alphat = scores[:, :T] - logz
    return alphat, ct


def reference_forward(inputs, hc, Wm, W1, V, *, context_window, hidden_dim,
                      matmul_dtype=jnp.float32):
    """Pure-JAX reference mirroring the PyTorch module (and, when
    matmul_dtype=bfloat16, the kernel's single bf16 copy of Mt/Wm)."""
    T, H = context_window, hidden_dim
    Mt = inputs.reshape(T, H).astype(matmul_dtype).astype(jnp.float32)
    Wm_c = Wm.astype(matmul_dtype).astype(jnp.float32)
    h_proj = hc.reshape(1, H) @ W1.T
    At = jnp.tanh(Mt @ Wm_c + h_proj) @ V                 # (T, 1)
    alphat = jax.nn.log_softmax(At.reshape(1, T), axis=1)
    ct = alphat @ Mt
    return alphat, ct


def _rel_err(a, b):
    return float(jnp.max(jnp.abs(a - b)) / (jnp.max(jnp.abs(b)) + 1.0))


if __name__ == "__main__":
    # ----- test 1: module demo sizes (T=8, H=32), f32 matmul ---------------
    hidden_dim, context_window = 32, 8
    key = jax.random.PRNGKey(0)
    k_in, k_hc, k_w1 = jax.random.split(key, 3)
    inputs = jax.random.normal(k_in, (context_window, hidden_dim), jnp.float32)
    hc = jax.random.normal(k_hc, (1, hidden_dim), jnp.float32)
    Wm = jnp.ones((hidden_dim, hidden_dim), jnp.float32)          # torch.ones
    V = jnp.ones((hidden_dim, 1), jnp.float32)                    # torch.ones
    bound = 1.0 / (hidden_dim ** 0.5)
    W1 = jax.random.uniform(k_w1, (hidden_dim, hidden_dim), jnp.float32,
                            minval=-bound, maxval=bound)

    alphat, ct = context_atten_forward(
        inputs, hc, Wm, W1, V,
        context_window=context_window, hidden_dim=hidden_dim)
    jax.block_until_ready((alphat, ct))
    a_ref, c_ref = reference_forward(
        inputs, hc, Wm, W1, V,
        context_window=context_window, hidden_dim=hidden_dim)
    assert alphat.shape == (1, context_window)
    assert ct.shape == (1, hidden_dim)
    # Streaming ct decomposition changes f32 association order slightly,
    # hence a relative (not 1e-5 absolute) comparison.
    assert _rel_err(alphat, a_ref) < 1e-4
    assert _rel_err(ct, c_ref) < 1e-4

    # ----- test 2: bf16 matmul operands (v6e/v7x MXU / HBM lever) ----------
    alphat_bf, ct_bf = context_atten_forward(
        inputs, hc, Wm, W1, V,
        context_window=context_window, hidden_dim=hidden_dim,
        matmul_dtype=jnp.bfloat16)
    jax.block_until_ready((alphat_bf, ct_bf))
    a_ref_bf, c_ref_bf = reference_forward(
        inputs, hc, Wm, W1, V,
        context_window=context_window, hidden_dim=hidden_dim,
        matmul_dtype=jnp.bfloat16)
    assert _rel_err(alphat_bf, a_ref_bf) < 2e-3
    assert _rel_err(ct_bf, c_ref_bf) < 2e-3

    # ----- test 3: multi-tile grid (streaming accumulator + tail masking) --
    hidden_dim, context_window = 128, 200
    k_in, k_hc, k_w1 = jax.random.split(jax.random.PRNGKey(1), 3)
    inputs = jax.random.normal(k_in, (context_window, hidden_dim), jnp.float32)
    hc = jax.random.normal(k_hc, (1, hidden_dim), jnp.float32)
    Wm = jnp.ones((hidden_dim, hidden_dim), jnp.float32)
    V = jnp.ones((hidden_dim, 1), jnp.float32)
    bound = 1.0 / (hidden_dim ** 0.5)
    W1 = jax.random.uniform(k_w1, (hidden_dim, hidden_dim), jnp.float32,
                            minval=-bound, maxval=bound)
    alphat3, ct3 = context_atten_forward(
        inputs, hc, Wm, W1, V,
        context_window=context_window, hidden_dim=hidden_dim, block_t=128)
    jax.block_until_ready((alphat3, ct3))
    a_ref3, c_ref3 = reference_forward(
        inputs, hc, Wm, W1, V,
        context_window=context_window, hidden_dim=hidden_dim)
    assert alphat3.shape == (1, context_window)
    assert ct3.shape == (1, hidden_dim)
    assert _rel_err(alphat3, a_ref3) < 1e-3
    assert _rel_err(ct3, c_ref3) < 1e-3

    print("KERNEL_OK")
</pallas_src>

<mosaic_0001>
module attributes {stable_mosaic.version = 11 : i64} {
  func.func @_context_atten_kernel(%arg0: i32, %arg1: memref<8x32xf32, #tpu.memory_space<vmem>>, %arg2: memref<32x32xf32, #tpu.memory_space<vmem>>, %arg3: memref<1x32xf32, #tpu.memory_space<vmem>>, %arg4: memref<1x32xf32, #tpu.memory_space<vmem>>, %arg5: memref<1x8xf32, #tpu.memory_space<vmem>>, %arg6: memref<1x1xf32, #tpu.memory_space<vmem>>, %arg7: memref<1x32xf32, #tpu.memory_space<vmem>>, %arg8: memref<1x1xf32, #tpu.memory_space<vmem>>, %arg9: memref<1x1xf32, #tpu.memory_space<vmem>>, %arg10: memref<1x32xf32, #tpu.memory_space<vmem>>, %arg11: memref<1x32xf32, #tpu.memory_space<vmem>>) attributes {dimension_semantics = [#tpu.dimension_semantics<arbitrary>], iteration_bounds = array<i64: 1>, scalar_prefetch = 0 : i64, scratch_operands = 4 : i64, tpu.core_type = #tpu.core_type<tc>, window_params = [{transform_indices = @transform_0, window_bounds = array<i64: 8, 32>}, {pipeline_mode = #tpu.pipeline_mode<synchronous>, transform_indices = @transform_1, window_bounds = array<i64: 32, 32>}, {pipeline_mode = #tpu.pipeline_mode<synchronous>, transform_indices = @transform_2, window_bounds = array<i64: 1, 32>}, {pipeline_mode = #tpu.pipeline_mode<synchronous>, transform_indices = @transform_3, window_bounds = array<i64: 1, 32>}, {transform_indices = @transform_4, window_bounds = array<i64: 1, 8>}, {pipeline_mode = #tpu.pipeline_mode<synchronous>, transform_indices = @transform_5, window_bounds = array<i64: 1, 1>}, {pipeline_mode = #tpu.pipeline_mode<synchronous>, transform_indices = @transform_6, window_bounds = array<i64: 1, 32>}]} {
    %c0_i32 = arith.constant 0 : i32
    %0 = arith.cmpi eq, %arg0, %c0_i32 : i32
    %1 = arith.extui %0 : i1 to i32
    %c0_i32_0 = arith.constant 0 : i32
    %2 = arith.cmpi ne, %1, %c0_i32_0 : i32
    scf.if %2 {
      %cst_35 = arith.constant 0xFF800000 : f32
      %56 = vector.broadcast %cst_35 : f32 to vector<1x1xf32>
      %c0_36 = arith.constant 0 : index
      %c0_37 = arith.constant 0 : index
      %57 = vector.load %arg8[%c0_36, %c0_37] : memref<1x1xf32, #tpu.memory_space<vmem>>, vector<1x1xf32>
      tpu.vector_store %arg8[%c0_36, %c0_37], %56 {strides = array<i32>} : memref<1x1xf32, #tpu.memory_space<vmem>>, vector<1x1xf32>,
      %cst_38 = arith.constant 0.000000e+00 : f32
      %58 = vector.broadcast %cst_38 : f32 to vector<1x1xf32>
      %c0_39 = arith.constant 0 : index
      %c0_40 = arith.constant 0 : index
      %59 = vector.load %arg9[%c0_39, %c0_40] : memref<1x1xf32, #tpu.memory_space<vmem>>, vector<1x1xf32>
      tpu.vector_store %arg9[%c0_39, %c0_40], %58 {strides = array<i32>} : memref<1x1xf32, #tpu.memory_space<vmem>>, vector<1x1xf32>,
      %cst_41 = arith.constant 0.000000e+00 : f32
      %60 = vector.broadcast %cst_41 : f32 to vector<1x32xf32>
      %c0_42 = arith.constant 0 : index
      %c0_43 = arith.constant 0 : index
      %61 = vector.load %arg10[%c0_42, %c0_43] : memref<1x32xf32, #tpu.memory_space<vmem>>, vector<1x32xf32>
      tpu.vector_store %arg10[%c0_42, %c0_43], %60 {strides = array<i32>} : memref<1x32xf32, #tpu.memory_space<vmem>>, vector<1x32xf32>,
      %cst_44 = arith.constant 0.000000e+00 : f32
      %62 = vector.broadcast %cst_44 : f32 to vector<1x32xf32>
      %c0_45 = arith.constant 0 : index
      %c0_46 = arith.constant 0 : index
      %63 = vector.load %arg11[%c0_45, %c0_46] : memref<1x32xf32, #tpu.memory_space<vmem>>, vector<1x32xf32>
      tpu.vector_store %arg11[%c0_45, %c0_46], %62 {strides = array<i32>} : memref<1x32xf32, #tpu.memory_space<vmem>>, vector<1x32xf32>,
    } else {
    }
    %c0 = arith.constant 0 : index
    %c0_1 = arith.constant 0 : index
    %3 = vector.load %arg1[%c0, %c0_1] : memref<8x32xf32, #tpu.memory_space<vmem>>, vector<8x32xf32>
    %c0_2 = arith.constant 0 : index
    %c0_3 = arith.constant 0 : index
    %4 = vector.load %arg2[%c0_2, %c0_3] : memref<32x32xf32, #tpu.memory_space<vmem>>, vector<32x32xf32>
    %cst = arith.constant dense<0.000000e+00> : vector<8x32xf32>
    %5 = tpu.matmul %3, %4, %cst {dimension_numbers = #tpu.dot_dimension_numbers<[1], [0], [0], [1], [0, 0, 1, 1], [], []>} : vector<8x32xf32>, vector<32x32xf32>, vector<8x32xf32> -> vector<8x32xf32>
    %c0_4 = arith.constant 0 : index
    %c0_5 = arith.constant 0 : index
    %6 = vector.load %arg3[%c0_4, %c0_5] : memref<1x32xf32, #tpu.memory_space<vmem>>, vector<1x32xf32>
    %7 = vector.broadcast %6 : vector<1x32xf32> to vector<8x32xf32>
    %8 = arith.addf %5, %7 : vector<8x32xf32>
    %9 = math.tanh %8 : vector<8x32xf32>
    %c0_6 = arith.constant 0 : index
    %c0_7 = arith.constant 0 : index
    %10 = vector.load %arg4[%c0_6, %c0_7] : memref<1x32xf32, #tpu.memory_space<vmem>>, vector<1x32xf32>
    %11 = vector.broadcast %10 : vector<1x32xf32> to vector<8x32xf32>
    %12 = arith.mulf %9, %11 : vector<8x32xf32>
    %cst_8 = arith.constant dense<0.000000e+00> : vector<8xf32>
    %13 = vector.multi_reduction <add>, %12, %cst_8 [1] : vector<8x32xf32> to vector<8xf32>
    %14 = vector.shape_cast %13 : vector<8xf32> to vector<8x1xf32>
    %c0_9 = arith.constant 0 : index
    %c0_10 = arith.constant 0 : index
    %15 = vector.load %arg8[%c0_9, %c0_10] : memref<1x1xf32, #tpu.memory_space<vmem>>, vector<1x1xf32>
    %cst_11 = arith.constant dense<0xFF800000> : vector<1xf32>
    %16 = vector.multi_reduction <maximumf>, %14, %cst_11 [0] : vector<8x1xf32> to vector<1xf32>
    %17 = vector.shape_cast %16 : vector<1xf32> to vector<1x1xf32>
    %18 = arith.maximumf %15, %17 : vector<1x1xf32>
    %c0_12 = arith.constant 0 : index
    %c0_13 = arith.constant 0 : index
    %19 = vector.load %arg9[%c0_12, %c0_13] : memref<1x1xf32, #tpu.memory_space<vmem>>, vector<1x1xf32>
    %20 = arith.subf %15, %18 : vector<1x1xf32>
    %21 = math.exp %20 : vector<1x1xf32>
    %22 = arith.mulf %19, %21 : vector<1x1xf32>
    %23 = vector.broadcast %18 : vector<1x1xf32> to vector<8x1xf32>
    %24 = arith.subf %14, %23 : vector<8x1xf32>
    %25 = math.exp %24 : vector<8x1xf32>
    %cst_14 = arith.constant dense<0.000000e+00> : vector<1xf32>
    %26 = vector.multi_reduction <add>, %25, %cst_14 [0] : vector<8x1xf32> to vector<1xf32>
    %27 = vector.shape_cast %26 : vector<1xf32> to vector<1x1xf32>
    %28 = arith.addf %22, %27 : vector<1x1xf32>
    %c0_15 = arith.constant 0 : index
    %c0_16 = arith.constant 0 : index
    %29 = vector.load %arg9[%c0_15, %c0_16] : memref<1x1xf32, #tpu.memory_space<vmem>>, vector<1x1xf32>
    tpu.vector_store %arg9[%c0_15, %c0_16], %28 {strides = array<i32>} : memref<1x1xf32, #tpu.memory_space<vmem>>, vector<1x1xf32>,
    %c0_17 = arith.constant 0 : index
    %c0_18 = arith.constant 0 : index
    %30 = vector.load %arg8[%c0_17, %c0_18] : memref<1x1xf32, #tpu.memory_space<vmem>>, vector<1x1xf32>
    tpu.vector_store %arg8[%c0_17, %c0_18], %18 {strides = array<i32>} : memref<1x1xf32, #tpu.memory_space<vmem>>, vector<1x1xf32>,
    %c0_19 = arith.constant 0 : index
    %c0_20 = arith.constant 0 : index
    %31 = vector.load %arg10[%c0_19, %c0_20] : memref<1x32xf32, #tpu.memory_space<vmem>>, vector<1x32xf32>
    %32 = vector.broadcast %14 : vector<8x1xf32> to vector<8x32xf32>
    %33 = arith.mulf %32, %3 : vector<8x32xf32>
    %cst_21 = arith.constant dense<0.000000e+00> : vector<32xf32>
    %34 = vector.multi_reduction <add>, %33, %cst_21 [0] : vector<8x32xf32> to vector<32xf32>
    %35 = vector.shape_cast %34 : vector<32xf32> to vector<1x32xf32>
    %36 = arith.addf %31, %35 : vector<1x32xf32>
    %c0_22 = arith.constant 0 : index
    %c0_23 = arith.constant 0 : index
    %37 = vector.load %arg10[%c0_22, %c0_23] : memref<1x32xf32, #tpu.memory_space<vmem>>, vector<1x32xf32>
    tpu.vector_store %arg10[%c0_22, %c0_23], %36 {strides = array<i32>} : memref<1x32xf32, #tpu.memory_space<vmem>>, vector<1x32xf32>,
    %c0_24 = arith.constant 0 : index
    %c0_25 = arith.constant 0 : index
    %38 = vector.load %arg11[%c0_24, %c0_25] : memref<1x32xf32, #tpu.memory_space<vmem>>, vector<1x32xf32>
    %cst_26 = arith.constant dense<0.000000e+00> : vector<32xf32>
    %39 = vector.multi_reduction <add>, %3, %cst_26 [0] : vector<8x32xf32> to vector<32xf32>
    %40 = vector.shape_cast %39 : vector<32xf32> to vector<1x32xf32>
    %41 = arith.addf %38, %40 : vector<1x32xf32>
    %c0_27 = arith.constant 0 : index
    %c0_28 = arith.constant 0 : index
    %42 = vector.load %arg11[%c0_27, %c0_28] : memref<1x32xf32, #tpu.memory_space<vmem>>, vector<1x32xf32>
    tpu.vector_store %arg11[%c0_27, %c0_28], %41 {strides = array<i32>} : memref<1x32xf32, #tpu.memory_space<vmem>>, vector<1x32xf32>,
    %43 = tpu.iota {dimensions = array<i32: 0>} : vector<8x8xi32>
    %44 = tpu.iota {dimensions = array<i32: 1>} : vector<8x8xi32>
    %45 = arith.cmpi eq, %43, %44 : vector<8x8xi32>
    %cst_29 = arith.constant 0.000000e+00 : f32
    %46 = vector.shape_cast %14 : vector<8x1xf32> to vector<8x1xf32>
    %47 = vector.broadcast %46 : vector<8x1xf32> to vector<8x8xf32>
    %48 = vector.broadcast %cst_29 : f32 to vector<8x8xf32>
    %49 = arith.select %45, %47, %48 : vector<8x8xi1>, vector<8x8xf32>
    %cst_30 = arith.constant dense<0.000000e+00> : vector<8xf32>
    %50 = vector.multi_reduction <add>, %49, %cst_30 [0] : vector<8x8xf32> to vector<8xf32>
    %51 = vector.shape_cast %50 : vector<8xf32> to vector<1x8xf32>
    %c0_31 = arith.constant 0 : index
    %c0_32 = arith.constant 0 : index
    %52 = vector.load %arg5[%c0_31, %c0_32] : memref<1x8xf32, #tpu.memory_space<vmem>>, vector<1x8xf32>
    tpu.vector_store %arg5[%c0_31, %c0_32], %51 {strides = array<i32>} : memref<1x8xf32, #tpu.memory_space<vmem>>, vector<1x8xf32>,
    %c0_i32_33 = arith.constant 0 : i32
    %53 = arith.cmpi eq, %arg0, %c0_i32_33 : i32
    %54 = arith.extui %53 : i1 to i32
    %c0_i32_34 = arith.constant 0 : i32
    %55 = arith.cmpi ne, %54, %c0_i32_34 : i32
    scf.if %55 {
      %c0_35 = arith.constant 0 : index
      %c0_36 = arith.constant 0 : index
      %56 = vector.load %arg8[%c0_35, %c0_36] : memref<1x1xf32, #tpu.memory_space<vmem>>, vector<1x1xf32>
      %c0_37 = arith.constant 0 : index
      %c0_38 = arith.constant 0 : index
      %57 = vector.load %arg9[%c0_37, %c0_38] : memref<1x1xf32, #tpu.memory_space<vmem>>, vector<1x1xf32>
      %58 = math.log %57 : vector<1x1xf32>
      %59 = arith.addf %56, %58 : vector<1x1xf32>
      %c0_39 = arith.constant 0 : index
      %c0_40 = arith.constant 0 : index
      %60 = vector.load %arg6[%c0_39, %c0_40] : memref<1x1xf32, #tpu.memory_space<vmem>>, vector<1x1xf32>
      tpu.vector_store %arg6[%c0_39, %c0_40], %59 {strides = array<i32>} : memref<1x1xf32, #tpu.memory_space<vmem>>, vector<1x1xf32>,
      %c0_41 = arith.constant 0 : index
      %c0_42 = arith.constant 0 : index
      %61 = vector.load %arg10[%c0_41, %c0_42] : memref<1x32xf32, #tpu.memory_space<vmem>>, vector<1x32xf32>
      %c0_43 = arith.constant 0 : index
      %c0_44 = arith.constant 0 : index
      %62 = vector.load %arg11[%c0_43, %c0_44] : memref<1x32xf32, #tpu.memory_space<vmem>>, vector<1x32xf32>
      %63 = vector.broadcast %59 : vector<1x1xf32> to vector<1x32xf32>
      %64 = arith.mulf %63, %62 : vector<1x32xf32>
      %65 = arith.subf %61, %64 : vector<1x32xf32>
      %c0_45 = arith.constant 0 : index
      %c0_46 = arith.constant 0 : index
      %66 = vector.load %arg7[%c0_45, %c0_46] : memref<1x32xf32, #tpu.memory_space<vmem>>, vector<1x32xf32>
      tpu.vector_store %arg7[%c0_45, %c0_46], %65 {strides = array<i32>} : memref<1x32xf32, #tpu.memory_space<vmem>>, vector<1x32xf32>,
    } else {
    }
    return
  }
  func.func @transform_0(%arg0: i32) -> (i32, i32) {
    %c0_i32 = arith.constant 0 : i32
    %c0_i32_0 = arith.constant 0 : i32
    return %arg0, %c0_i32 : i32, i32
  }
  func.func @transform_1(%arg0: i32) -> (i32, i32) {
    %c0_i32 = arith.constant 0 : i32
    %c0_i32_0 = arith.constant 0 : i32
    %c0_i32_1 = arith.constant 0 : i32
    return %c0_i32, %c0_i32_0 : i32, i32
  }
  func.func @transform_2(%arg0: i32) -> (i32, i32) {
    %c0_i32 = arith.constant 0 : i32
    %c0_i32_0 = arith.constant 0 : i32
    %c0_i32_1 = arith.constant 0 : i32
    return %c0_i32, %c0_i32_0 : i32, i32
  }
  func.func @transform_3(%arg0: i32) -> (i32, i32) {
    %c0_i32 = arith.constant 0 : i32
    %c0_i32_0 = arith.constant 0 : i32
    %c0_i32_1 = arith.constant 0 : i32
    return %c0_i32, %c0_i32_0 : i32, i32
  }
  func.func @transform_4(%arg0: i32) -> (i32, i32) {
    %c0_i32 = arith.constant 0 : i32
    %c0_i32_0 = arith.constant 0 : i32
    return %c0_i32, %arg0 : i32, i32
  }
  func.func @transform_5(%arg0: i32) -> (i32, i32) {
    %c0_i32 = arith.constant 0 : i32
    %c0_i32_0 = arith.constant 0 : i32
    %c0_i32_1 = arith.constant 0 : i32
    return %c0_i32, %c0_i32_0 : i32, i32
  }
  func.func @transform_6(%arg0: i32) -> (i32, i32) {
    %c0_i32 = arith.constant 0 : i32
    %c0_i32_0 = arith.constant 0 : i32
    %c0_i32_1 = arith.constant 0 : i32
    return %c0_i32, %c0_i32_0 : i32, i32
  }
}

</mosaic_0001>

<llo_original>
// kernel: context_atten_forward.1
$region0: #{context_atten_forward.1}
  #allocation0 [shape = 'u32[]', space=smem, size = 0x4, offset = 0x4, fixed_abs, tag = 'smem constant byte address 0x4 - core index']
  #allocation1 [shape = 'u32[144,128]{1,0:T(1,128)}', space=vmem, size = 0x12000, scoped, tag = 'internal scratch']
  #allocation2 [shape = 'f32[1,1]{1,0:T(1,128)}', space=vmem, size = 0x200, scoped, tag = 'scratch operand']
  #allocation3 [shape = 'f32[1,1]{1,0:T(1,128)}', space=vmem, size = 0x200, scoped, tag = 'scratch operand']
  #allocation4 [shape = 'f32[1,32]{1,0:T(1,128)}', space=vmem, size = 0x200, scoped, tag = 'scratch operand']
  #allocation5 [shape = 'f32[1,32]{1,0:T(1,128)}', space=vmem, size = 0x200, scoped, tag = 'scratch operand']
  %s0 = inlined_call_operand.vmem [shape: f32[8,32], index: 0, kind: input, shape index: {}]
  %s1 = inlined_call_operand.vmem [shape: f32[32,32], index: 1, kind: input, shape index: {}]
  %s2 = inlined_call_operand.vmem [shape: f32[1,32], index: 2, kind: input, shape index: {}]
  %s3 = inlined_call_operand.vmem [shape: f32[1,32], index: 3, kind: input, shape index: {}]
  %s4 = inlined_call_operand.vmem [shape: f32[1,8], index: 4, kind: output, shape index: {0}]
  %s5 = inlined_call_operand.hbm [shape: f32[1,1], index: 5, kind: output, shape index: {1}]
  %s6 = inlined_call_operand.hbm [shape: f32[1,32], index: 6, kind: output, shape index: {2}]
  %7 = xla_tuple %s4, %s5, %s6
  %s8 = sld [smem:[#allocation0]]
  $region50: #{context_atten_forward.1} parent=0
    _
  %s10 = ssub.s32 1, %s8
  %s11 = scalar_select 0, %s10, %s8
  $region1: #{context_atten_forward.1} parent=0
    #allocation6 [shape = 'u8[512]{0}', space=vmem, size = 0x400, scoped, tag = 'output window, operand 1, single buffered']
    #allocation7 [shape = 's32[1]{0}', space=sflag, size = 0x4, scoped, tag = 'scoped memory for context_atten_forward.1']
    #allocation8 [shape = 'u8[512]{0}', space=vmem, size = 0x400, scoped, tag = 'output window, operand 2, single buffered']
    #allocation9 [shape = 's32[1]{0}', space=sflag, size = 0x4, scoped, tag = 'scoped memory for context_atten_forward.1']
    %12 = vsyncpa [#allocation7], 0
    %13 = vsyncpa [#allocation9], 0
    // Predicated region
    $region2: #{context_atten_forward.1} parent=1 // pred_check
      _
    $region3: #{context_atten_forward.1} parent=1 // pred_check_branch
      %15 = sbr.rel (0) target = $region5
    $region4: #{context_atten_forward.1} parent=1 // pred_region
      _
    $region5: #{context_atten_forward.1} parent=1 // pred_fallthru
      _
    // Predicated region
    $region6: #{context_atten_forward.1} parent=1 // pred_check
      _
    $region7: #{context_atten_forward.1} parent=1 // pred_check_branch
      %17 = sbr.rel (0) target = $region9
    $region8: #{context_atten_forward.1} parent=1 // pred_region
      _
    $region9: #{context_atten_forward.1} parent=1 // pred_fallthru
      _
    // Predicated region
    $region10: #{context_atten_forward.1} parent=1 // pred_check
      _
    $region11: #{context_atten_forward.1} parent=1 // pred_check_branch
      %19 = sbr.rel (0) target = $region13
    $region12: #{context_atten_forward.1} parent=1 // pred_region
      _
    $region13: #{context_atten_forward.1} parent=1 // pred_fallthru
      _
    // Predicated region
    $region14: #{context_atten_forward.1} parent=1 // pred_check
      _
    $region15: #{context_atten_forward.1} parent=1 // pred_check_branch
      %21 = sbr.rel (0) target = $region17
    $region16: #{context_atten_forward.1} parent=1 // pred_region
      _
    $region17: #{context_atten_forward.1} parent=1 // pred_fallthru
      _
    %p22 = scmp.eq.s32.totalorder 0, 0
    // Predicated region
    $region18: #{context_atten_forward.1} parent=1 // pred_check
      %p23 = pneg %p22
    $region19: #{context_atten_forward.1} parent=1 // pred_check_branch
      %25 = sbr.rel (%p23) target = $region21
    $region20: #{context_atten_forward.1} parent=1 // pred_region
      %vm26 = vcmask 0
      %27 = vst.msk [vmem:[#allocation2] sm:$0x1] %vm26, -inf
      %28 = vst.msk [vmem:[#allocation3] sm:$0x1] %vm26, 0.0
      %vm29 = vcmask 253952
      %30 = vst.msk [vmem:[#allocation4] sm:$0x1] %vm29, 0.0
      %31 = vst.msk [vmem:[#allocation5] sm:$0x1] %vm29, 0.0
    $region21: #{context_atten_forward.1} parent=1 // pred_fallthru
      _
    %v32 = vld [vmem:[%s0] sm:$0xff]
    %v33 = vld [vmem:[%s1] sm:$0xff]
    %v34 = vld [vmem:[%s1 + $0x8] sm:$0xff]
    %v35 = vld [vmem:[%s1 + $0x10] sm:$0xff]
    %v36 = vld [vmem:[%s1 + $0x18] sm:$0xff]
    %v37 = vld [vmem:[%s2] sm:$0x1]
    %v39 = vlaneseq
    %v40 = vshrl.u32 %v39, 7
    %v41 = vsub.s32 0, %v40
    %v42 = vrot.slane %v37, %v41
    %vm44 = vcmask 261120
    %v46 = vsel %vm44, %v32, 0
    %48 = vmatprep.subr.mxu0 0.0
    %49 = vmatpush1.msra.mxu0 0.0
    %50 = vmatprep.subr.mxu0 0.0
    %51 = vmatpush1.msra.mxu0 0.0
    %52 = vmatprep.subr.mxu0 0.0
    %53 = vmatpush1.msra.mxu0 0.0
    %54 = vmatprep.subr.mxu0 0.0
    %55 = vmatpush1.msra.mxu0 0.0
    %56 = vmatprep.subr.mxu0 0.0
    %57 = vmatpush1.msra.mxu0 0.0
    %58 = vmatprep.subr.mxu0 0.0
    %59 = vmatpush1.msra.mxu0 0.0
    %60 = vmatprep.subr.mxu0 0.0
    %61 = vmatpush1.msra.mxu0 0.0
    %62 = vmatprep.subr.mxu0 0.0
    %63 = vmatpush1.msra.mxu0 0.0
    %64 = vmatprep.subr.mxu0 0.0
    %65 = vmatpush1.msra.mxu0 0.0
    %66 = vmatprep.subr.mxu0 0.0
    %67 = vmatpush1.msra.mxu0 0.0
    %68 = vmatprep.subr.mxu0 0.0
    %69 = vmatpush1.msra.mxu0 0.0
    %70 = vmatprep.subr.mxu0 0.0
    %71 = vmatpush1.msra.mxu0 0.0
    %72 = vmatprep.subr.mxu0 0.0
    %73 = vmatpush1.msra.mxu0 %v36
    %74 = vmatprep.subr.mxu0 0.0
    %75 = vmatpush1.msra.mxu0 %v35
    %76 = vmatprep.subr.mxu0 0.0
    %77 = vmatpush1.msra.mxu0 %v34
    %78 = vmatprep.subr.mxu0 0.0
    %79 = vmatpush1.msra.mxu0 %v33
    %80 = vmatprep.subr.mxu0 0.0
    %81 = vmatpush2.msra.mxu0 0.0
    %82 = vmatprep.subr.mxu0 0.0
    %83 = vmatpush2.msra.mxu0 0.0
    %84 = vmatprep.subr.mxu0 0.0
    %85 = vmatpush2.msra.mxu0 0.0
    %86 = vmatprep.subr.mxu0 0.0
    %87 = vmatpush2.msra.mxu0 0.0
    %88 = vmatprep.subr.mxu0 0.0
    %89 = vmatpush2.msra.mxu0 0.0
    %90 = vmatprep.subr.mxu0 0.0
    %91 = vmatpush2.msra.mxu0 0.0
    %92 = vmatprep.subr.mxu0 0.0
    %93 = vmatpush2.msra.mxu0 0.0
    %94 = vmatprep.subr.mxu0 0.0
    %95 = vmatpush2.msra.mxu0 0.0
    %96 = vmatprep.subr.mxu0 0.0
    %97 = vmatpush2.msra.mxu0 0.0
    %98 = vmatprep.subr.mxu0 0.0
    %99 = vmatpush2.msra.mxu0 0.0
    %100 = vmatprep.subr.mxu0 0.0
    %101 = vmatpush2.msra.mxu0 0.0
    %102 = vmatprep.subr.mxu0 0.0
    %103 = vmatpush2.msra.mxu0 0.0
    %104 = vmatprep.subr.mxu0 0.0
    %105 = vmatpush2.msra.mxu0 0.0
    %106 = vmatprep.subr.mxu0 0.0
    %107 = vmatpush2.msra.mxu0 0.0
    %108 = vmatprep.subr.mxu0 0.0
    %109 = vmatpush2.msra.mxu0 0.0
    %110 = vmatprep.subr.mxu0 0.0
    %111 = vmatpush2.msra.mxu0 0.0
    %112 = vmatprep.mubr.f32.mxu0 0.0
    %113 = vmatmul.mubr.f32.gmra.mxu0 %v46
    %v114 = vpop.f32.mrf.mxu0
    %v115 = vadd.f32 %v42, %v114
    %v116 = vpop.f32.mrf.mxu0
    %117 = vdwg.mxu0
    %v118 = vtanh.pop %v115
    %v119 = vld [vmem:[%s3] sm:$0x1]
    %v121 = vlaneseq
    %v122 = vshrl.u32 %v121, 7
    %v123 = vsub.s32 0, %v122
    %v124 = vrot.slane %v119, %v123
    %v126 = vmul.f32 %v118, %v124
    %v127 = vsel %vm44, %v126, 0.0
    %128 = vadd.xlane.f32.xlu0 %v127
    %v129 = vpop.xlane.xlu0 %128
    %v130 = vld [vmem:[#allocation2] sm:$0x1]
    %v131 = vrot.slane %v129, 4
    %v132 = vmax.f32 %v129, %v131
    %v133 = vrot.slane %v132, 2
    %v134 = vmax.f32 %v132, %v133
    %v135 = vrot.slane %v134, 1
    %v136 = vmax.f32 %v134, %v135
    %v137 = vmax.f32 %v130, %v136
    %v138 = vld [vmem:[#allocation3] sm:$0x1]
    %v139 = vsub.f32 %v130, %v137
    %v140 = vmul.f32 %v139, 1.442695
    %v141 = vpow.pop %v140
    %v142 = vmul.f32 %v138, %v141
    %v144 = vlaneseq
    %v145 = vshrl.u32 %v144, 7
    %v146 = vsub.s32 0, %v145
    %v147 = vrot.slane %v137, %v146
    %v149 = vsub.f32 %v129, %v147
    %v150 = vmul.f32 %v149, 1.442695
    %v151 = vpow.pop %v150
    %vm152 = vcmask 7168
    %v153 = vsel %vm152, %v151, 0.0
    %v154 = vrot.slane %v153, 4
    %v155 = vadd.f32 %v153, %v154
    %v156 = vrot.slane %v155, 2
    %v157 = vadd.f32 %v155, %v156
    %v158 = vrot.slane %v157, 1
    %v159 = vadd.f32 %v157, %v158
    %v160 = vadd.f32 %v142, %v159
    %vm161 = vcmask 0
    %162 = vst.msk [vmem:[#allocation3] sm:$0x1] %vm161, %v160
    %163 = vst.msk [vmem:[#allocation2] sm:$0x1] %vm161, %v137
    %v164 = vld [vmem:[#allocation4] sm:$0x1]
    %v165 = vmul.f32 %v129, %v32
    %v166 = vsel %vm44, %v165, 0.0
    %v167 = vrot.slane %v166, 4
    %v168 = vadd.f32 %v166, %v167
    %v169 = vrot.slane %v168, 2
    %v170 = vadd.f32 %v168, %v169
    %v171 = vrot.slane %v170, 1
    %v172 = vadd.f32 %v170, %v171
    %v173 = vadd.f32 %v164, %v172
    %vm174 = vcmask 253952
    %175 = vst.msk [vmem:[#allocation4] sm:$0x1] %vm174, %v173
    %v176 = vld [vmem:[#allocation5] sm:$0x1]
    %v177 = vsel %vm44, %v32, 0.0
    %v178 = vrot.slane %v177, 4
    %v179 = vadd.f32 %v177, %v178
    %v180 = vrot.slane %v179, 2
    %v181 = vadd.f32 %v179, %v180
    %v182 = vrot.slane %v181, 1
    %v183 = vadd.f32 %v181, %v182
    %v184 = vadd.f32 %v176, %v183
    %185 = vst.msk [vmem:[#allocation5] sm:$0x1] %vm174, %v184
    %v186 = vlaneseq
    %v187 = vshrl.u32 %v186, 7
    %v188 = vlaneseq
    %v189 = vand.u32 %v188, 127
    %vm190 = vcmp.eq.s32.totalorder %v187, %v189
    %v191 = vsel %vm190, %v129, 0.0
    %vm192 = vcmask 64512
    %v193 = vsel %vm192, %v191, 0.0
    %v194 = vrot.slane %v193, 4
    %v195 = vadd.f32 %v193, %v194
    %v196 = vrot.slane %v195, 2
    %v197 = vadd.f32 %v195, %v196
    %v198 = vrot.slane %v197, 1
    %v199 = vadd.f32 %v197, %v198
    %vm200 = vcmask 57344
    %201 = vst.msk [vmem:[%s4] sm:$0x1] %vm200, %v199
    // Predicated region
    $region22: #{context_atten_forward.1} parent=1 // pred_check
      %p202 = pneg %p22
    $region23: #{context_atten_forward.1} parent=1 // pred_check_branch
      %204 = sbr.rel (%p202) target = $region25
    $region24: #{context_atten_forward.1} parent=1 // pred_region
      %v205 = vld [vmem:[#allocation2] sm:$0x1]
      %v206 = vld [vmem:[#allocation3] sm:$0x1]
      %v207 = vlog2.pop %v206
      %v208 = vmul.f32 %v207, 0.6931472
      %v209 = vadd.f32 %v205, %v208
      %210 = vst.msk [vmem:[#allocation6] sm:$0x1] %vm161, %v209
      %v211 = vld [vmem:[#allocation4] sm:$0x1]
      %v212 = vld [vmem:[#allocation5] sm:$0x1]
      %214 = vset.pattern.permute.xlu0 0
      %215 = vperm.xlu0 %214, %v209
      %v216 = vpop.permute.xlu0 %215
      %v218 = vlaneseq
      %v219 = vshrl.u32 %v218, 7
      %v220 = vsub.s32 0, %v219
      %v221 = vrot.slane %v216, %v220
      %v222 = vmul.f32 %v221, %v212
      %v223 = vsub.f32 %v211, %v222
      %224 = vst.msk [vmem:[#allocation8] sm:$0x1] %vm174, %v223
    $region25: #{context_atten_forward.1} parent=1 // pred_fallthru
      _
    // Predicated region
    $region26: #{context_atten_forward.1} parent=1 // pred_check
      _
    $region27: #{context_atten_forward.1} parent=1 // pred_check_branch
      %226 = sbr.rel (0) target = $region29
    $region28: #{context_atten_forward.1} parent=1 // pred_region
      _
    $region29: #{context_atten_forward.1} parent=1 // pred_fallthru
      _
    // Predicated region
    $region30: #{context_atten_forward.1} parent=1 // pred_check
      _
    $region31: #{context_atten_forward.1} parent=1 // pred_check_branch
      %228 = sbr.rel (0) target = $region33
    $region32: #{context_atten_forward.1} parent=1 // pred_region
      %s230 = ssub.s32 16, 16
      %231 = vsyncadd [#allocation7], %s230
      %s233 = sshll.u32 [#allocation6], 4
      %s234 = int_to_ptr.vmem [resolvable:$true] %s233
      %236 = dma.vmem_to_hbm [thread:$0]  %s234, 16, %s5, [#allocation7]
    $region33: #{context_atten_forward.1} parent=1 // pred_fallthru
      _
    // Predicated region
    $region34: #{context_atten_forward.1} parent=1 // pred_check
      _
    $region35: #{context_atten_forward.1} parent=1 // pred_check_branch
      %238 = sbr.rel (0) target = $region37
    $region36: #{context_atten_forward.1} parent=1 // pred_region
      %s240 = ssub.s32 16, 16
      %241 = vsyncadd [#allocation9], %s240
      %s243 = sshll.u32 [#allocation8], 4
      %s244 = int_to_ptr.vmem [resolvable:$true] %s243
      %246 = dma.vmem_to_hbm [thread:$0]  %s244, 16, %s6, [#allocation9]
    $region37: #{context_atten_forward.1} parent=1 // pred_fallthru
      _
    // Predicated region
    $region38: #{context_atten_forward.1} parent=1 // pred_check
      _
    $region39: #{context_atten_forward.1} parent=1 // pred_check_branch
      %248 = sbr.rel (0) target = $region41
    $region40: #{context_atten_forward.1} parent=1 // pred_region
      _
    $region41: #{context_atten_forward.1} parent=1 // pred_fallthru
      _
    // Predicated region
    $region42: #{context_atten_forward.1} parent=1 // pred_check
      _
    $region43: #{context_atten_forward.1} parent=1 // pred_check_branch
      %250 = sbr.rel (0) target = $region45
    $region44: #{context_atten_forward.1} parent=1 // pred_region
      %251 = dma.done [#allocation7], 16
    $region45: #{context_atten_forward.1} parent=1 // pred_fallthru
      _
    // Predicated region
    $region46: #{context_atten_forward.1} parent=1 // pred_check
      _
    $region47: #{context_atten_forward.1} parent=1 // pred_check_branch
      %253 = sbr.rel (0) target = $region49
    $region48: #{context_atten_forward.1} parent=1 // pred_region
      %254 = dma.done [#allocation9], 16
    $region49: #{context_atten_forward.1} parent=1 // pred_fallthru
      _
    %255 = vsyncpa [#allocation7], 1
    %256 = vsyncpa [#allocation9], 1

</llo_original>
